<compile_context>
chip_gen: v7x
topology: tpu7x:2x2x1
jax: 0.10.0
libtpu: 0.0.40
codegen_flags: <defaults>
</compile_context>

<pallas_src>
import functools

import jax
import jax.numpy as jnp
from jax import lax
from jax.experimental import pallas as pl
from jax.experimental.pallas import tpu as pltpu


def _contrastive_loss_kernel(im_ref, s_ref, d_ref, out_ref, *,
                             margin, B, TJ, max_violation):
    jb = pl.program_id(0)

    # scores[m, i] = sum_d s[j(m), k(m), d] * im[i, d]
    # where, within this block, m = t*B + k and j(m) = jb*TJ + t.
    # Last-dim/last-dim contraction -> no transpose; f32 MXU accumulation.
    scores = lax.dot_general(
        s_ref[...], im_ref[...],
        dimension_numbers=(((1,), (1,)), ((), ())),
        preferred_element_type=jnp.float32)                       # (TJ*B, B)

    # d_ref[m, 0] = diag[j(m)]  (precomputed in the wrapper); lane-broadcast.
    cost = jnp.maximum(margin + scores - d_ref[...], 0.0)         # (TJ*B, B)

    if max_violation:
        if margin > 0.0:
            # Zero this block's (i, i, i) entries: (m, i) with i == jb*TJ + t
            # and k == i  <=>  m == (i - jb*TJ)*B + i.  (Only needed when
            # margin > 0; otherwise the masked value is ~0 and cannot move
            # the max.)
            row = lax.broadcasted_iota(jnp.int32, (TJ * B, B), 0)   # m
            col = lax.broadcasted_iota(jnp.int32, (TJ * B, B), 1)   # i
            j0 = jb * TJ
            sel = ((row == (col - j0) * B + col)
                   & (col >= j0) & (col < j0 + TJ))
            cost = jnp.where(sel, 0.0, cost)
        cost3 = jnp.reshape(cost, (TJ, B, B))                     # (TJ, B, B)
        per_j = jnp.max(jnp.max(cost3, axis=2, keepdims=True),
                        axis=1, keepdims=True)                    # (TJ, 1, 1)
        partial = jnp.sum(per_j)
    else:
        # The TJ diagonal entries of this block each equal relu(margin) up to
        # accumulation-order noise; the wrapper subtracts B*relu(margin) once
        # instead of masking every tile.
        partial = jnp.sum(cost)

    out_ref[...] = jnp.reshape(partial, (1, 1))


def _vmem_limit_bytes():
    """Physical-VMEM-aware scoped limit (v7x: 64 MiB, v5e/v6e: 128 MiB)."""
    cap = 64 * 1024 * 1024
    try:
        info = pltpu.get_tpu_info()
        for name in ("vmem_capacity_bytes", "vmem_bytes", "vmem_size_bytes"):
            val = getattr(info, name, None)
            if val:
                cap = int(val)
                break
    except Exception:
        pass
    return max(32 * 1024 * 1024, min(cap * 3 // 4, 112 * 1024 * 1024))


def _choose_block_j(B, D, itemsize, vmem_budget):
    """Largest TJ dividing B whose per-step working set fits the budget."""
    best = 1
    for tj in range(1, B + 1):
        if B % tj:
            continue
        need = (2 * tj * B * D * itemsize      # double-buffered s block
                + 2 * tj * B * 4               # double-buffered diag column
                + 2 * B * D * itemsize         # resident im (x2 buffers)
                + 4 * tj * B * B * 4)          # f32 scores/cost temporaries
        if need <= vmem_budget:
            best = tj
    return best


def contrastive_loss_3d(im, s, margin=0.0, max_violation=False,
                        block_j=None, compute_dtype=None):
    """im: (B, D); s: anything reshapeable to (B, B, D)."""
    B, D = im.shape
    s3 = jnp.reshape(s, (B, B, D))
    if compute_dtype is not None:
        im = im.astype(compute_dtype)
        s3 = s3.astype(compute_dtype)
    itemsize = jnp.dtype(im.dtype).itemsize

    # diag[j] = im[j] . s[j, j]  (f32, from the same cast operands).
    idx = jnp.arange(B)
    diag = jnp.sum(im.astype(jnp.float32) * s3[idx, idx, :].astype(jnp.float32),
                   axis=-1)                                       # (B,)

    vmem_limit = _vmem_limit_bytes()
    if block_j is None:
        tj = _choose_block_j(B, D, itemsize, int(vmem_limit * 0.6))
    else:
        tj = int(block_j)
        if B % tj != 0:
            raise ValueError(f"block_j={tj} must divide B={B}")
    num_jb = B // tj
    tjb = tj * B

    # Block jb holds rows s[jb*TJ:(jb+1)*TJ, :, :] flattened -> one big DMA/step.
    s_blocks = jnp.reshape(s3, (num_jb, tjb, D))
    # diag[j] repeated B times as a column -> broadcasts along lanes in-kernel.
    d_col = jnp.reshape(jnp.repeat(diag, B), (num_jb, tjb, 1))

    kernel = functools.partial(
        _contrastive_loss_kernel, margin=float(margin), B=B, TJ=tj,
        max_violation=bool(max_violation))

    partials = pl.pallas_call(
        kernel,
        out_shape=jax.ShapeDtypeStruct((num_jb, 1, 1), jnp.float32),
        grid=(num_jb,),
        in_specs=[
            pl.BlockSpec((B, D), lambda jb: (0, 0)),               # im (resident)
            pl.BlockSpec((None, tjb, D), lambda jb: (jb, 0, 0)),   # s block (pipelined)
            pl.BlockSpec((None, tjb, 1), lambda jb: (jb, 0, 0)),   # diag column
        ],
        out_specs=pl.BlockSpec((None, 1, 1), lambda jb: (jb, 0, 0)),
        compiler_params=pltpu.CompilerParams(
            dimension_semantics=("parallel",),
            vmem_limit_bytes=vmem_limit),
    )(im, s_blocks, d_col)

    loss = jnp.sum(partials)
    if not max_violation:
        # The B entries at (i, i, i) each contribute relu(margin) before masking;
        # subtract them once here instead of masking every tile.
        loss = loss - float(B) * max(float(margin), 0.0)
    return loss


def _reference_loss(im, s, margin=0.0, max_violation=False):
    """Pure-JAX reference mirroring the PyTorch forward."""
    B, D = im.shape
    s3 = jnp.reshape(s, (B, B, D)).astype(jnp.float32)
    im32 = im.astype(jnp.float32)
    scores = jnp.einsum("id,jkd->ijk", im32, s3,
                        precision=lax.Precision.HIGHEST)          # (B, B, B)
    idx = jnp.arange(B)
    diag = jnp.sum(im32 * s3[idx, idx, :], axis=-1)               # (B,)
    cost2 = jnp.maximum(margin + scores - diag[None, :, None], 0.0)
    eye3 = ((idx[:, None, None] == idx[None, :, None])
            & (idx[:, None, None] == idx[None, None, :]))
    cost2 = jnp.where(eye3, 0.0, cost2)
    if max_violation:
        cost2 = jnp.max(jnp.max(cost2, axis=0), axis=-1)
    return jnp.sum(cost2)


if __name__ == "__main__":
    B, D = 8, 32  # B images, D-dim embeddings; s provides B*B caption embeddings
    key = jax.random.PRNGKey(0)
    k_im, k_s = jax.random.split(key)
    im = jax.random.normal(k_im, (B, D), dtype=jnp.float32)
    s = jax.random.normal(k_s, (B, B, D), dtype=jnp.float32)

    ok = True
    # f32 operands: VSE0 / margin / VSE++ variants, default TJ and TJ=2 (grid>1).
    cases = [
        dict(margin=0.0, max_violation=False, block_j=None),
        dict(margin=0.2, max_violation=False, block_j=None),
        dict(margin=0.2, max_violation=True,  block_j=None),
        dict(margin=0.0, max_violation=True,  block_j=2),
        dict(margin=0.2, max_violation=False, block_j=2),
        dict(margin=0.2, max_violation=True,  block_j=2),
    ]
    for c in cases:
        loss = contrastive_loss_3d(im, s, margin=c["margin"],
                                   max_violation=c["max_violation"],
                                   block_j=c["block_j"])
        loss = jax.block_until_ready(loss)
        ref = jax.block_until_ready(
            _reference_loss(im, s, margin=c["margin"],
                            max_violation=c["max_violation"]))
        if not jnp.allclose(loss, ref, rtol=1e-4, atol=1e-2):
            ok = False
            print("MISMATCH", c, float(loss), float(ref))

    # bf16 operands (reference sees the same bf16-rounded inputs).
    im_b = im.astype(jnp.bfloat16)
    s_b = s.astype(jnp.bfloat16)
    for margin, mv, bj in [(0.2, False, 2), (0.2, True, None)]:
        loss = contrastive_loss_3d(im, s, margin=margin, max_violation=mv,
                                   block_j=bj, compute_dtype=jnp.bfloat16)
        loss = jax.block_until_ready(loss)
        ref = jax.block_until_ready(
            _reference_loss(im_b, s_b, margin=margin, max_violation=mv))
        if not jnp.allclose(loss, ref, rtol=1e-3, atol=1e-2):
            ok = False
            print("MISMATCH bf16", margin, mv, float(loss), float(ref))

    assert ok
    print("KERNEL_OK")
</pallas_src>

<mosaic_0001>
module attributes {stable_mosaic.version = 11 : i64} {
  func.func @_contrastive_loss_kernel(%arg0: i32, %arg1: memref<8x32xf32, #tpu.memory_space<vmem>>, %arg2: memref<1x64x32xf32, #tpu.memory_space<vmem>>, %arg3: memref<1x64x1xf32, #tpu.memory_space<vmem>>, %arg4: memref<1x1x1xf32, #tpu.memory_space<vmem>>) attributes {dimension_semantics = [#tpu.dimension_semantics<parallel>], iteration_bounds = array<i64: 1>, scalar_prefetch = 0 : i64, scratch_operands = 0 : i64, tpu.core_type = #tpu.core_type<tc>, window_params = [{pipeline_mode = #tpu.pipeline_mode<synchronous>, transform_indices = @transform_0, window_bounds = array<i64: 8, 32>}, {transform_indices = @transform_1, window_bounds = array<i64: 1, 64, 32>}, {transform_indices = @transform_2, window_bounds = array<i64: 1, 64, 1>}, {transform_indices = @transform_3, window_bounds = array<i64: 1, 1, 1>}]} {
    %c0 = arith.constant 0 : index
    %c0_0 = arith.constant 0 : index
    %c0_1 = arith.constant 0 : index
    %0 = vector.load %arg2[%c0, %c0_0, %c0_1] : memref<1x64x32xf32, #tpu.memory_space<vmem>>, vector<1x64x32xf32>
    %1 = vector.shape_cast %0 : vector<1x64x32xf32> to vector<64x32xf32>
    %c0_2 = arith.constant 0 : index
    %c0_3 = arith.constant 0 : index
    %2 = vector.load %arg1[%c0_2, %c0_3] : memref<8x32xf32, #tpu.memory_space<vmem>>, vector<8x32xf32>
    %cst = arith.constant dense<0.000000e+00> : vector<64x8xf32>
    %3 = tpu.matmul %1, %2, %cst {dimension_numbers = #tpu.dot_dimension_numbers<[1], [1], [0], [0], [0, 0, 1, 0], [], []>} : vector<64x32xf32>, vector<8x32xf32>, vector<64x8xf32> -> vector<64x8xf32>
    %cst_4 = arith.constant 0.000000e+00 : f32
    %4 = vector.broadcast %cst_4 : f32 to vector<64x8xf32>
    %5 = arith.addf %4, %3 : vector<64x8xf32>
    %c0_5 = arith.constant 0 : index
    %c0_6 = arith.constant 0 : index
    %c0_7 = arith.constant 0 : index
    %6 = vector.load %arg3[%c0_5, %c0_6, %c0_7] : memref<1x64x1xf32, #tpu.memory_space<vmem>>, vector<1x64x1xf32>
    %7 = vector.shape_cast %6 : vector<1x64x1xf32> to vector<64x1xf32>
    %8 = vector.broadcast %7 : vector<64x1xf32> to vector<64x8xf32>
    %9 = arith.subf %5, %8 : vector<64x8xf32>
    %cst_8 = arith.constant 0.000000e+00 : f32
    %10 = vector.broadcast %cst_8 : f32 to vector<64x8xf32>
    %11 = arith.maximumf %9, %10 : vector<64x8xf32>
    %12 = vector.shape_cast %11 : vector<64x8xf32> to vector<1x64x8xf32>
    %cst_9 = arith.constant dense<0.000000e+00> : vector<1xf32>
    %13 = vector.multi_reduction <add>, %12, %cst_9 [1, 2] : vector<1x64x8xf32> to vector<1xf32>
    %14 = vector.shape_cast %13 : vector<1xf32> to vector<1x1x1xf32>
    %15 = vector.extract %14[0, 0, 0] : f32 from vector<1x1x1xf32>
    %16 = vector.broadcast %15 : f32 to vector<1x1xf32>
    %c0_10 = arith.constant 0 : index
    %c0_11 = arith.constant 0 : index
    %c0_12 = arith.constant 0 : index
    %17 = vector.load %arg4[%c0_10, %c0_11, %c0_12] : memref<1x1x1xf32, #tpu.memory_space<vmem>>, vector<1x1x1xf32>
    %18 = vector.shape_cast %17 : vector<1x1x1xf32> to vector<1x1xf32>
    %19 = vector.shape_cast %16 : vector<1x1xf32> to vector<1x1x1xf32>
    tpu.vector_store %arg4[%c0_10, %c0_11, %c0_12], %19 {strides = array<i32>} : memref<1x1x1xf32, #tpu.memory_space<vmem>>, vector<1x1x1xf32>,
    return
  }
  func.func @transform_0(%arg0: i32) -> (i32, i32) {
    %c0_i32 = arith.constant 0 : i32
    %c0_i32_0 = arith.constant 0 : i32
    %c0_i32_1 = arith.constant 0 : i32
    return %c0_i32, %c0_i32_0 : i32, i32
  }
  func.func @transform_1(%arg0: i32) -> (i32, i32, i32) {
    %c0_i32 = arith.constant 0 : i32
    %c0_i32_0 = arith.constant 0 : i32
    %c0_i32_1 = arith.constant 0 : i32
    return %arg0, %c0_i32, %c0_i32_0 : i32, i32, i32
  }
  func.func @transform_2(%arg0: i32) -> (i32, i32, i32) {
    %c0_i32 = arith.constant 0 : i32
    %c0_i32_0 = arith.constant 0 : i32
    %c0_i32_1 = arith.constant 0 : i32
    return %arg0, %c0_i32, %c0_i32_0 : i32, i32, i32
  }
  func.func @transform_3(%arg0: i32) -> (i32, i32, i32) {
    %c0_i32 = arith.constant 0 : i32
    %c0_i32_0 = arith.constant 0 : i32
    %c0_i32_1 = arith.constant 0 : i32
    return %arg0, %c0_i32, %c0_i32_0 : i32, i32, i32
  }
}

</mosaic_0001>

<llo_original>
// kernel: tpu_custom_call.1
$region0: #{tpu_custom_call.1}
  #allocation0 [shape = 'u32[]', space=smem, size = 0x4, offset = 0x4, fixed_abs, tag = 'smem constant byte address 0x4 - core index']
  #allocation1 [shape = 'u32[144,128]{1,0:T(1,128)}', space=vmem, size = 0x12000, scoped, tag = 'internal scratch']
  %s0 = inlined_call_operand.vmem [shape: f32[8,32], index: 0, kind: input, shape index: {}]
  %s1 = inlined_call_operand.vmem [shape: f32[1,64,32], index: 1, kind: input, shape index: {}]
  %s2 = inlined_call_operand.vmem [shape: f32[1,64,1], index: 2, kind: input, shape index: {}]
  %s3 = inlined_call_operand.hbm [shape: f32[1,1,1], index: 3, kind: output, shape index: {}]
  %s4 = sld [smem:[#allocation0]]
  $region22: #{tpu_custom_call.1} parent=0
    _
  %s6 = ssub.s32 1, %s4
  %s7 = scalar_select 0, %s6, %s4
  $region1: #{tpu_custom_call.1} parent=0
    #allocation2 [shape = 'u8[512]{0}', space=vmem, size = 0x400, scoped, tag = 'output window, operand 0, single buffered']
    #allocation3 [shape = 's32[1]{0}', space=sflag, size = 0x4, scoped, tag = 'scoped memory for tpu_custom_call.1']
    %8 = vsyncpa [#allocation3], 0
    // Predicated region
    $region2: #{tpu_custom_call.1} parent=1 // pred_check
      _
    $region3: #{tpu_custom_call.1} parent=1 // pred_check_branch
      %10 = sbr.rel (0) target = $region5
    $region4: #{tpu_custom_call.1} parent=1 // pred_region
      _
    $region5: #{tpu_custom_call.1} parent=1 // pred_fallthru
      _
    // Predicated region
    $region6: #{tpu_custom_call.1} parent=1 // pred_check
      _
    $region7: #{tpu_custom_call.1} parent=1 // pred_check_branch
      %12 = sbr.rel (0) target = $region9
    $region8: #{tpu_custom_call.1} parent=1 // pred_region
      _
    $region9: #{tpu_custom_call.1} parent=1 // pred_fallthru
      _
    // Predicated region
    $region10: #{tpu_custom_call.1} parent=1 // pred_check
      _
    $region11: #{tpu_custom_call.1} parent=1 // pred_check_branch
      %14 = sbr.rel (0) target = $region13
    $region12: #{tpu_custom_call.1} parent=1 // pred_region
      _
    $region13: #{tpu_custom_call.1} parent=1 // pred_fallthru
      _
    %v15 = vld [vmem:[%s1] sm:$0xff]
    %v16 = vld [vmem:[%s1 + $0x8] sm:$0xff]
    %v17 = vld [vmem:[%s1 + $0x10] sm:$0xff]
    %v18 = vld [vmem:[%s1 + $0x18] sm:$0xff]
    %v19 = vld [vmem:[%s1 + $0x20] sm:$0xff]
    %v20 = vld [vmem:[%s1 + $0x28] sm:$0xff]
    %v21 = vld [vmem:[%s1 + $0x30] sm:$0xff]
    %v22 = vld [vmem:[%s1 + $0x38] sm:$0xff]
    %v23 = vld [vmem:[%s0] sm:$0xff]
    %vm24 = vcmask 261120
    %v26 = vsel %vm24, %v15, 0
    %v29 = vsel %vm24, %v16, 0
    %v32 = vsel %vm24, %v17, 0
    %v35 = vsel %vm24, %v18, 0
    %v38 = vsel %vm24, %v19, 0
    %v41 = vsel %vm24, %v20, 0
    %v44 = vsel %vm24, %v21, 0
    %v47 = vsel %vm24, %v22, 0
    %v50 = vsel %vm24, %v23, 0
    %52 = vmatprep.subr.mxu0 0.0
    %53 = vmatpush1.xpose.msra.mxu0 %v50
    %54 = vmatprep.subr.mxu0 0.0
    %55 = vmatpush1.xpose.msra.mxu0 0.0
    %56 = vmatprep.subr.mxu0 0.0
    %57 = vmatpush1.xpose.msra.mxu0 0.0
    %58 = vmatprep.subr.mxu0 0.0
    %59 = vmatpush1.xpose.msra.mxu0 0.0
    %60 = vmatprep.subr.mxu0 0.0
    %61 = vmatpush1.xpose.msra.mxu0 0.0
    %62 = vmatprep.subr.mxu0 0.0
    %63 = vmatpush1.xpose.msra.mxu0 0.0
    %64 = vmatprep.subr.mxu0 0.0
    %65 = vmatpush1.xpose.msra.mxu0 0.0
    %66 = vmatprep.subr.mxu0 0.0
    %67 = vmatpush1.xpose.msra.mxu0 0.0
    %68 = vmatprep.subr.mxu0 0.0
    %69 = vmatpush1.xpose.msra.mxu0 0.0
    %70 = vmatprep.subr.mxu0 0.0
    %71 = vmatpush1.xpose.msra.mxu0 0.0
    %72 = vmatprep.subr.mxu0 0.0
    %73 = vmatpush1.xpose.msra.mxu0 0.0
    %74 = vmatprep.subr.mxu0 0.0
    %75 = vmatpush1.xpose.msra.mxu0 0.0
    %76 = vmatprep.subr.mxu0 0.0
    %77 = vmatpush1.xpose.msra.mxu0 0.0
    %78 = vmatprep.subr.mxu0 0.0
    %79 = vmatpush1.xpose.msra.mxu0 0.0
    %80 = vmatprep.subr.mxu0 0.0
    %81 = vmatpush1.xpose.msra.mxu0 0.0
    %82 = vmatprep.subr.mxu0 0.0
    %83 = vmatpush1.xpose.msra.mxu0 0.0
    %84 = vmatprep.subr.mxu0 0.0
    %85 = vmatpush1.xpose.msra.mxu0 0.0
    %86 = vmatprep.subr.mxu0 0.0
    %87 = vmatpush1.xpose.msra.mxu0 0.0
    %88 = vmatprep.subr.mxu0 0.0
    %89 = vmatpush1.xpose.msra.mxu0 0.0
    %90 = vmatprep.subr.mxu0 0.0
    %91 = vmatpush1.xpose.msra.mxu0 0.0
    %92 = vmatprep.subr.mxu0 0.0
    %93 = vmatpush1.xpose.msra.mxu0 0.0
    %94 = vmatprep.subr.mxu0 0.0
    %95 = vmatpush1.xpose.msra.mxu0 0.0
    %96 = vmatprep.subr.mxu0 0.0
    %97 = vmatpush1.xpose.msra.mxu0 0.0
    %98 = vmatprep.subr.mxu0 0.0
    %99 = vmatpush1.xpose.msra.mxu0 0.0
    %100 = vmatprep.subr.mxu0 0.0
    %101 = vmatpush1.xpose.msra.mxu0 0.0
    %102 = vmatprep.subr.mxu0 0.0
    %103 = vmatpush1.xpose.msra.mxu0 0.0
    %104 = vmatprep.subr.mxu0 0.0
    %105 = vmatpush1.xpose.msra.mxu0 0.0
    %106 = vmatprep.subr.mxu0 0.0
    %107 = vmatpush1.xpose.msra.mxu0 0.0
    %108 = vmatprep.subr.mxu0 0.0
    %109 = vmatpush1.xpose.msra.mxu0 0.0
    %110 = vmatprep.subr.mxu0 0.0
    %111 = vmatpush1.xpose.msra.mxu0 0.0
    %112 = vmatprep.subr.mxu0 0.0
    %113 = vmatpush1.xpose.msra.mxu0 0.0
    %114 = vmatprep.subr.mxu0 0.0
    %115 = vmatpush1.xpose.msra.mxu0 0.0
    %116 = vmatprep.mubr.f32.mxu0 0.0
    %117 = vmatmul.mubr.f32.gmra.mrb[0].mxu0 %v26
    %v118 = vpop.f32.mrb[0].mxu0
    %v119 = vadd.f32 0.0, %v118
    %v120 = vpop.f32.mrb[0].mxu0
    %121 = vmatprep.mubr.f32.mxu0 0.0
    %122 = vmatmul.mubr.f32.gmra.mrb[0].mxu0 %v29
    %v123 = vpop.f32.mrb[0].mxu0
    %v124 = vadd.f32 0.0, %v123
    %v125 = vpop.f32.mrb[0].mxu0
    %126 = vmatprep.mubr.f32.mxu0 0.0
    %127 = vmatmul.mubr.f32.gmra.mrb[0].mxu0 %v32
    %v128 = vpop.f32.mrb[0].mxu0
    %v129 = vadd.f32 0.0, %v128
    %v130 = vpop.f32.mrb[0].mxu0
    %131 = vmatprep.mubr.f32.mxu0 0.0
    %132 = vmatmul.mubr.f32.gmra.mrb[0].mxu0 %v35
    %v133 = vpop.f32.mrb[0].mxu0
    %v134 = vadd.f32 0.0, %v133
    %v135 = vpop.f32.mrb[0].mxu0
    %136 = vmatprep.mubr.f32.mxu0 0.0
    %137 = vmatmul.mubr.f32.gmra.mrb[0].mxu0 %v38
    %v138 = vpop.f32.mrb[0].mxu0
    %v139 = vadd.f32 0.0, %v138
    %v140 = vpop.f32.mrb[0].mxu0
    %141 = vmatprep.mubr.f32.mxu0 0.0
    %142 = vmatmul.mubr.f32.gmra.mrb[0].mxu0 %v41
    %v143 = vpop.f32.mrb[0].mxu0
    %v144 = vadd.f32 0.0, %v143
    %v145 = vpop.f32.mrb[0].mxu0
    %146 = vmatprep.mubr.f32.mxu0 0.0
    %147 = vmatmul.mubr.f32.gmra.mrb[0].mxu0 %v44
    %v148 = vpop.f32.mrb[0].mxu0
    %v149 = vadd.f32 0.0, %v148
    %v150 = vpop.f32.mrb[0].mxu0
    %151 = vmatprep.mubr.f32.mxu0 0.0
    %152 = vmatmul.mubr.f32.gmra.mrb[0].mxu0 %v47
    %v153 = vpop.f32.mrb[0].mxu0
    %v154 = vadd.f32 0.0, %v153
    %v155 = vpop.f32.mrb[0].mxu0
    %156 = vdwg.mxu0
    %v157 = vld [vmem:[%s2] sm:$0xff]
    %v158 = vld [vmem:[%s2 + $0x8] sm:$0xff]
    %v159 = vld [vmem:[%s2 + $0x10] sm:$0xff]
    %v160 = vld [vmem:[%s2 + $0x18] sm:$0xff]
    %v161 = vld [vmem:[%s2 + $0x20] sm:$0xff]
    %v162 = vld [vmem:[%s2 + $0x28] sm:$0xff]
    %v163 = vld [vmem:[%s2 + $0x30] sm:$0xff]
    %v164 = vld [vmem:[%s2 + $0x38] sm:$0xff]
    %166 = vset.pattern.permute.xlu0 0
    %167 = vperm.xlu0 %166, %v157
    %v168 = vpop.permute.xlu0 %167
    %171 = vset.pattern.permute.xlu0 0
    %172 = vperm.xlu0 %171, %v158
    %v173 = vpop.permute.xlu0 %172
    %176 = vset.pattern.permute.xlu0 0
    %177 = vperm.xlu0 %176, %v159
    %v178 = vpop.permute.xlu0 %177
    %181 = vset.pattern.permute.xlu0 0
    %182 = vperm.xlu0 %181, %v160
    %v183 = vpop.permute.xlu0 %182
    %186 = vset.pattern.permute.xlu0 0
    %187 = vperm.xlu0 %186, %v161
    %v188 = vpop.permute.xlu0 %187
    %191 = vset.pattern.permute.xlu0 0
    %192 = vperm.xlu0 %191, %v162
    %v193 = vpop.permute.xlu0 %192
    %196 = vset.pattern.permute.xlu0 0
    %197 = vperm.xlu0 %196, %v163
    %v198 = vpop.permute.xlu0 %197
    %201 = vset.pattern.permute.xlu0 0
    %202 = vperm.xlu0 %201, %v164
    %v203 = vpop.permute.xlu0 %202
    %v205 = vsub.f32 %v119, %v168
    %v206 = vsub.f32 %v124, %v173
    %v207 = vsub.f32 %v129, %v178
    %v208 = vsub.f32 %v134, %v183
    %v209 = vsub.f32 %v139, %v188
    %v210 = vsub.f32 %v144, %v193
    %v211 = vsub.f32 %v149, %v198
    %v212 = vsub.f32 %v154, %v203
    %v213 = vmax.f32 %v205, 0.0
    %v214 = vmax.f32 %v206, 0.0
    %v215 = vmax.f32 %v207, 0.0
    %v216 = vmax.f32 %v208, 0.0
    %v217 = vmax.f32 %v209, 0.0
    %v218 = vmax.f32 %v210, 0.0
    %v219 = vmax.f32 %v211, 0.0
    %v220 = vmax.f32 %v212, 0.0
    %vm221 = vcmask 64512
    %v222 = vsel %vm221, %v213, 0.0
    %v223 = vsel %vm221, %v214, 0.0
    %v224 = vadd.f32 %v222, %v223
    %v225 = vsel %vm221, %v215, 0.0
    %v226 = vadd.f32 %v224, %v225
    %v227 = vsel %vm221, %v216, 0.0
    %v228 = vadd.f32 %v226, %v227
    %v229 = vsel %vm221, %v217, 0.0
    %v230 = vadd.f32 %v228, %v229
    %v231 = vsel %vm221, %v218, 0.0
    %v232 = vadd.f32 %v230, %v231
    %v233 = vsel %vm221, %v219, 0.0
    %v234 = vadd.f32 %v232, %v233
    %v235 = vsel %vm221, %v220, 0.0
    %v236 = vadd.f32 %v234, %v235
    %237 = vadd.xlane.f32.xlu0 %v236
    %v238 = vpop.xlane.xlu0 %237
    %v239 = vrot.slane %v238, 4
    %v240 = vadd.f32 %v238, %v239
    %v241 = vrot.slane %v240, 2
    %v242 = vadd.f32 %v240, %v241
    %v243 = vrot.slane %v242, 1
    %v244 = vadd.f32 %v242, %v243
    %s245 = vtos %v244
    %v246 = vstv %s245
    %vm247 = vcmask 0
    %248 = vst.msk [vmem:[#allocation2] sm:$0x1] %vm247, %v246
    // Predicated region
    $region14: #{tpu_custom_call.1} parent=1 // pred_check
      _
    $region15: #{tpu_custom_call.1} parent=1 // pred_check_branch
      %250 = sbr.rel (0) target = $region17
    $region16: #{tpu_custom_call.1} parent=1 // pred_region
      %s252 = ssub.s32 16, 16
      %253 = vsyncadd [#allocation3], %s252
      %s255 = sshll.u32 [#allocation2], 4
      %s256 = int_to_ptr.vmem [resolvable:$true] %s255
      %258 = dma.vmem_to_hbm [thread:$0]  %s256, 16, %s3, [#allocation3]
    $region17: #{tpu_custom_call.1} parent=1 // pred_fallthru
      _
    // Predicated region
    $region18: #{tpu_custom_call.1} parent=1 // pred_check
      _
    $region19: #{tpu_custom_call.1} parent=1 // pred_check_branch
      %260 = sbr.rel (0) target = $region21
    $region20: #{tpu_custom_call.1} parent=1 // pred_region
      %261 = dma.done [#allocation3], 16
    $region21: #{tpu_custom_call.1} parent=1 // pred_fallthru
      _
    %262 = vsyncpa [#allocation3], 1

</llo_original>
